<compile_context>
chip_gen: v6e
topology: v6e:2x2x1
jax: 0.10.0
libtpu: 0.0.40
codegen_flags: <defaults>
</compile_context>

<pallas_src>
from functools import partial

import jax
import jax.numpy as jnp
from jax import lax
from jax.experimental import pallas as pl
from jax.experimental.pallas import tpu as pltpu

EPS = 1e-5


# ---------------------------------------------------------------------------
# VMEM budget / tile selection
# ---------------------------------------------------------------------------

def _vmem_budget_bytes():
    """(vmem_limit_bytes, per-kernel block budget) sized per TPU generation."""
    cap = None
    try:
        cap = int(getattr(pltpu.get_tpu_info(), "vmem_capacity_bytes"))
    except Exception:
        cap = None
    if not cap or cap <= 0:
        cap = 64 * 1024 * 1024  # conservative fallback = v7x per-TensorCore VMEM
    # ~48 MiB on v7x (64 MiB/TC), ~96 MiB on v5e/v6e (128 MiB) -- leaves headroom for
    # Mosaic internal scratch and other XLA fusions.
    vmem_limit = min(int(cap * 0.75), 100 * 1024 * 1024)
    block_budget = int(vmem_limit * 0.80)
    return vmem_limit, block_budget


def _channel_tile_candidates(C):
    """Sublane-aligned channel tiles (multiples of 8 dividing C), largest first."""
    if C % 8 != 0:
        return [C]  # ragged channel count: block must span the full C axis
    return sorted([t for t in range(8, C + 1, 8) if C % t == 0], reverse=True)


def _fused_working_set(half, tc, hw, isz):
    # 2x double-buffered input block + 2x output block + ~3 row-sized f32 temps.
    return 4 * half * tc * hw * isz + 3 * tc * hw * 4


def _pick_fused_tile(C, half, hw, isz, budget):
    """Largest feasible channel tile; prefers >=4 channel tiles for pipelining."""
    best = None
    for t in _channel_tile_candidates(C):
        if _fused_working_set(half, t, hw, isz) > budget:
            continue
        if best is None:
            best = t
        if C // t >= 4:          # enough grid steps to hide DMA behind compute
            best = t
            break
    return best                  # None => fall back to the two-pass row-tiled path


def _pick_two_pass_tiles(C, half, hw, isz, budget):
    """(tile_c, rows-per-block) for the row-tiled two-pass path."""
    cands = _channel_tile_candidates(C)

    def ws(t, nb):
        return 4 * nb * t * hw * isz + 3 * t * hw * 4

    feasible = [t for t in cands if ws(t, 1) <= budget]
    if not feasible:
        # TODO(synk): a single-image, minimum-width channel block already exceeds VMEM;
        # would need additional H/W tiling. Use the smallest tile anyway.
        feasible = [cands[-1]]
    with_steps = [t for t in feasible if C // t >= 4]
    tc = with_steps[0] if with_steps else feasible[0]

    divisors = sorted([d for d in range(1, half + 1) if half % d == 0], reverse=True)
    target_chunks = min(half, 4)   # guarantee a few row chunks so double-buffering overlaps
    good = [d for d in divisors if ws(tc, d) <= budget and half // d >= target_chunks]
    ok = [d for d in divisors if ws(tc, d) <= budget]
    nb = good[0] if good else (ok[0] if ok else 1)
    return tc, nb


# ---------------------------------------------------------------------------
# Kernels
# ---------------------------------------------------------------------------

def _make_fused_kernel(half, hw):
    """One batch-half, one channel tile, all rows resident: stats + apply in VMEM."""
    inv_m = 1.0 / float(half * hw)
    unroll = half <= 8

    def kernel(x_ref, w_ref, b_ref, o_ref):
        tc = x_ref.shape[1]

        # Per-channel mean, accumulated one batch row at a time (row-sized f32 temps only).
        def sum_body(i, acc):
            xi = x_ref[i].astype(jnp.float32)                      # (tc, hw)
            return acc + jnp.sum(xi, axis=-1, keepdims=True)
        s = lax.fori_loop(0, half, sum_body,
                          jnp.zeros((tc, 1), jnp.float32), unroll=unroll)
        mean = s * inv_m                                           # (tc, 1)

        # Centered sum of squares -> biased variance (matches PyTorch train mode).
        def ssq_body(i, acc):
            d = x_ref[i].astype(jnp.float32) - mean
            return acc + jnp.sum(d * d, axis=-1, keepdims=True)
        ssq = lax.fori_loop(0, half, ssq_body,
                            jnp.zeros((tc, 1), jnp.float32), unroll=unroll)

        scale = lax.rsqrt(ssq * inv_m + EPS) * w_ref[...].astype(jnp.float32)
        off = b_ref[...].astype(jnp.float32) - mean * scale

        # Apply, one batch row at a time.
        def apply_body(i, carry):
            xi = x_ref[i].astype(jnp.float32)
            o_ref[i] = (xi * scale + off).astype(o_ref.dtype)
            return carry
        lax.fori_loop(0, half, apply_body, 0, unroll=unroll)

    return kernel


def _make_stats_kernel(nb, hw, half):
    """Pass 1 of the row-tiled path: Welford-merge per-channel stats across row chunks."""
    total = float(half * hw)
    chunk = float(nb * hw)
    inv_chunk = 1.0 / chunk
    unroll = nb <= 8

    def kernel(x_ref, w_ref, b_ref, scale_ref, off_ref, mean_sc, m2_sc):
        r = pl.program_id(2)
        tc = x_ref.shape[1]

        @pl.when(r == 0)
        def _():
            mean_sc[...] = jnp.zeros_like(mean_sc)
            m2_sc[...] = jnp.zeros_like(m2_sc)

        # Chunk statistics (centered within the chunk).
        def sum_body(i, acc):
            return acc + jnp.sum(x_ref[i].astype(jnp.float32), axis=-1, keepdims=True)
        cs = lax.fori_loop(0, nb, sum_body,
                           jnp.zeros((tc, 1), jnp.float32), unroll=unroll)
        cmean = cs * inv_chunk

        def ssq_body(i, acc):
            d = x_ref[i].astype(jnp.float32) - cmean
            return acc + jnp.sum(d * d, axis=-1, keepdims=True)
        cm2 = lax.fori_loop(0, nb, ssq_body,
                            jnp.zeros((tc, 1), jnp.float32), unroll=unroll)

        # Chan / Welford merge with the running (mean, M2); counts are affine in r.
        n_a = (r * (nb * hw)).astype(jnp.float32)
        n_ab = n_a + chunk
        delta = cmean - mean_sc[...]
        mean_sc[...] = mean_sc[...] + delta * (chunk / n_ab)
        m2_sc[...] = m2_sc[...] + cm2 + delta * delta * (n_a * chunk / n_ab)

        @pl.when(r == pl.num_programs(2) - 1)
        def _():
            var = m2_sc[...] / total
            sc = lax.rsqrt(var + EPS) * w_ref[...].astype(jnp.float32)
            scale_ref[...] = sc
            off_ref[...] = b_ref[...].astype(jnp.float32) - mean_sc[...] * sc

    return kernel


def _make_apply_kernel(nb):
    """Pass 2 of the row-tiled path: purely elementwise y = x * scale[c] + off[c]."""
    unroll = nb <= 8

    def kernel(x_ref, scale_ref, off_ref, o_ref):
        scale = scale_ref[...]          # (tc, 1) f32
        off = off_ref[...]

        def body(i, carry):
            xi = x_ref[i].astype(jnp.float32)
            o_ref[i] = (xi * scale + off).astype(o_ref.dtype)
            return carry
        lax.fori_loop(0, nb, body, 0, unroll=unroll)

    return kernel


# ---------------------------------------------------------------------------
# Wrapper
# ---------------------------------------------------------------------------

@partial(jax.jit, static_argnames=("force_two_pass",))
def cdbn2d_train(x, weight, bias, force_two_pass=False):
    """Training-mode CDBN2d forward. x: (N, C, H, W), N even; weight/bias: (C,)."""
    N, C, H, W = x.shape
    assert N % 2 == 0, "CDBN2d requires an even batch size in training mode"
    half = N // 2
    HW = H * W
    isz = jnp.dtype(x.dtype).itemsize

    # Free views only -- no HBM-moving transposes.
    xv = x.reshape(2, half, C, HW)                     # channels on sublanes, HW on lanes
    w2 = weight.reshape(C, 1).astype(jnp.float32)
    b2 = bias.reshape(C, 1).astype(jnp.float32)

    vmem_limit, budget = _vmem_budget_bytes()
    tc_fused = _pick_fused_tile(C, half, HW, isz, budget)

    if tc_fused is not None and not force_two_pass:
        # --- fused single-pass path: stats + apply in one kernel, 2x HBM traffic ---
        out = pl.pallas_call(
            _make_fused_kernel(half, HW),
            out_shape=jax.ShapeDtypeStruct((2, half, C, HW), x.dtype),
            grid_spec=pltpu.PrefetchScalarGridSpec(
                num_scalar_prefetch=0,
                grid=(2, C // tc_fused),
                in_specs=[
                    pl.BlockSpec((None, half, tc_fused, HW), lambda h, j: (h, 0, j, 0)),
                    pl.BlockSpec((tc_fused, 1), lambda h, j: (j, 0)),
                    pl.BlockSpec((tc_fused, 1), lambda h, j: (j, 0)),
                ],
                out_specs=pl.BlockSpec((None, half, tc_fused, HW),
                                       lambda h, j: (h, 0, j, 0)),
            ),
            compiler_params=pltpu.CompilerParams(
                dimension_semantics=("parallel", "parallel"),
                vmem_limit_bytes=vmem_limit),
        )(xv, w2, b2)
    else:
        # --- two-pass row-tiled path for large (N/2)*H*W ---
        tc, nb = _pick_two_pass_tiles(C, half, HW, isz, budget)
        n_ct = C // tc
        n_rb = half // nb

        # Pass 1: per-(half, channel) fused scale/offset via Welford-merged statistics.
        scale, off = pl.pallas_call(
            _make_stats_kernel(nb, HW, half),
            out_shape=(jax.ShapeDtypeStruct((2, C, 1), jnp.float32),
                       jax.ShapeDtypeStruct((2, C, 1), jnp.float32)),
            grid_spec=pltpu.PrefetchScalarGridSpec(
                num_scalar_prefetch=0,
                grid=(2, n_ct, n_rb),
                in_specs=[
                    pl.BlockSpec((None, nb, tc, HW), lambda h, j, r: (h, r, j, 0)),
                    pl.BlockSpec((tc, 1), lambda h, j, r: (j, 0)),
                    pl.BlockSpec((tc, 1), lambda h, j, r: (j, 0)),
                ],
                out_specs=[
                    pl.BlockSpec((None, tc, 1), lambda h, j, r: (h, j, 0)),
                    pl.BlockSpec((None, tc, 1), lambda h, j, r: (h, j, 0)),
                ],
                scratch_shapes=[pltpu.VMEM((tc, 1), jnp.float32),
                                pltpu.VMEM((tc, 1), jnp.float32)],
            ),
            compiler_params=pltpu.CompilerParams(
                dimension_semantics=("parallel", "parallel", "arbitrary"),
                vmem_limit_bytes=vmem_limit),
        )(xv, w2, b2)

        # Pass 2: elementwise apply over the same row tiles (all axes independent).
        out = pl.pallas_call(
            _make_apply_kernel(nb),
            out_shape=jax.ShapeDtypeStruct((2, half, C, HW), x.dtype),
            grid_spec=pltpu.PrefetchScalarGridSpec(
                num_scalar_prefetch=0,
                grid=(2, n_ct, n_rb),
                in_specs=[
                    pl.BlockSpec((None, nb, tc, HW), lambda h, j, r: (h, r, j, 0)),
                    pl.BlockSpec((None, tc, 1), lambda h, j, r: (h, j, 0)),
                    pl.BlockSpec((None, tc, 1), lambda h, j, r: (h, j, 0)),
                ],
                out_specs=pl.BlockSpec((None, nb, tc, HW), lambda h, j, r: (h, r, j, 0)),
            ),
            compiler_params=pltpu.CompilerParams(
                dimension_semantics=("parallel", "parallel", "parallel"),
                vmem_limit_bytes=vmem_limit),
        )(xv, scale, off)

    return out.reshape(N, C, H, W)


# ---------------------------------------------------------------------------
# Pure-JAX reference (PyTorch CDBN2d train-mode forward)
# ---------------------------------------------------------------------------

def cdbn2d_ref(x, weight, bias):
    N = x.shape[0]
    w = weight[None, :, None, None]
    b = bias[None, :, None, None]

    def bn(h):
        mean = jnp.mean(h, axis=(0, 2, 3), keepdims=True)
        var = jnp.mean((h - mean) ** 2, axis=(0, 2, 3), keepdims=True)
        return (h - mean) / jnp.sqrt(var + EPS) * w + b

    return jnp.concatenate([bn(x[: N // 2]), bn(x[N // 2:])], axis=0)


if __name__ == "__main__":
    key = jax.random.PRNGKey(0)
    kx, kw, kb = jax.random.split(key, 3)

    # Small, lane/sublane-friendly demo shape: batch=4 (2 per half), 64 planes, 8x8 spatial.
    N, C, H, W = 4, 64, 8, 8
    x = jax.random.normal(kx, (N, C, H, W), dtype=jnp.float32)
    weight = jax.random.normal(kw, (C,), dtype=jnp.float32)   # plays the role of BN_T.weight
    bias = jax.random.normal(kb, (C,), dtype=jnp.float32)     # plays the role of BN_T.bias

    ref = cdbn2d_ref(x, weight, bias)

    # Fused single-pass path.
    out_fused = jax.block_until_ready(cdbn2d_train(x, weight, bias))
    assert out_fused.shape == x.shape
    assert jnp.allclose(out_fused, ref, atol=1e-4, rtol=1e-5), "fused path mismatch"

    # Row-tiled two-pass path (forced, to exercise the large-shape fallback).
    out_two = jax.block_until_ready(cdbn2d_train(x, weight, bias, force_two_pass=True))
    assert jnp.allclose(out_two, ref, atol=1e-4, rtol=1e-5), "two-pass path mismatch"

    # Ragged shape (odd channels / spatial): full-extent block path.
    N2, C2, H2, W2 = 2, 12, 5, 7
    x2 = jax.random.normal(kx, (N2, C2, H2, W2), dtype=jnp.float32)
    w2 = jax.random.normal(kw, (C2,), dtype=jnp.float32)
    b2 = jax.random.normal(kb, (C2,), dtype=jnp.float32)
    out2 = jax.block_until_ready(cdbn2d_train(x2, w2, b2))
    assert jnp.allclose(out2, cdbn2d_ref(x2, w2, b2), atol=1e-4, rtol=1e-5), "ragged mismatch"

    print("KERNEL_OK")
</pallas_src>

<mosaic_0001>
module attributes {stable_mosaic.version = 11 : i64} {
  func.func @kernel(%arg0: i32, %arg1: i32, %arg2: memref<1x2x16x64xf32, #tpu.memory_space<vmem>>, %arg3: memref<16x1xf32, #tpu.memory_space<vmem>>, %arg4: memref<16x1xf32, #tpu.memory_space<vmem>>, %arg5: memref<1x2x16x64xf32, #tpu.memory_space<vmem>>) attributes {dimension_semantics = [#tpu.dimension_semantics<parallel>, #tpu.dimension_semantics<parallel>], iteration_bounds = array<i64: 2, 4>, scalar_prefetch = 0 : i64, scratch_operands = 0 : i64, tpu.core_type = #tpu.core_type<tc>, window_params = [{transform_indices = @transform_0, window_bounds = array<i64: 1, 2, 16, 64>}, {transform_indices = @transform_1, window_bounds = array<i64: 16, 1>}, {transform_indices = @transform_2, window_bounds = array<i64: 16, 1>}, {transform_indices = @transform_3, window_bounds = array<i64: 1, 2, 16, 64>}]} {
    %cst = arith.constant 0.000000e+00 : f32
    %0 = vector.broadcast %cst : f32 to vector<16x1xf32>
    %c0_i32 = arith.constant 0 : i32
    %c0 = arith.constant 0 : index
    %1 = arith.index_cast %c0_i32 : i32 to index
    %c0_0 = arith.constant 0 : index
    %c0_1 = arith.constant 0 : index
    %2 = vector.load %arg2[%c0, %1, %c0_0, %c0_1] : memref<1x2x16x64xf32, #tpu.memory_space<vmem>>, vector<1x1x16x64xf32>
    %3 = vector.shape_cast %2 : vector<1x1x16x64xf32> to vector<16x64xf32>
    %cst_2 = arith.constant dense<0.000000e+00> : vector<16xf32>
    %4 = vector.multi_reduction <add>, %3, %cst_2 [1] : vector<16x64xf32> to vector<16xf32>
    %5 = vector.shape_cast %4 : vector<16xf32> to vector<16x1xf32>
    %6 = arith.addf %0, %5 : vector<16x1xf32>
    %c1_i32 = arith.constant 1 : i32
    %c0_3 = arith.constant 0 : index
    %7 = arith.index_cast %c1_i32 : i32 to index
    %c0_4 = arith.constant 0 : index
    %c0_5 = arith.constant 0 : index
    %8 = vector.load %arg2[%c0_3, %7, %c0_4, %c0_5] : memref<1x2x16x64xf32, #tpu.memory_space<vmem>>, vector<1x1x16x64xf32>
    %9 = vector.shape_cast %8 : vector<1x1x16x64xf32> to vector<16x64xf32>
    %cst_6 = arith.constant dense<0.000000e+00> : vector<16xf32>
    %10 = vector.multi_reduction <add>, %9, %cst_6 [1] : vector<16x64xf32> to vector<16xf32>
    %11 = vector.shape_cast %10 : vector<16xf32> to vector<16x1xf32>
    %12 = arith.addf %6, %11 : vector<16x1xf32>
    %c2_i32 = arith.constant 2 : i32
    %cst_7 = arith.constant 7.812500e-03 : f32
    %13 = vector.broadcast %cst_7 : f32 to vector<16x1xf32>
    %14 = arith.mulf %12, %13 : vector<16x1xf32>
    %cst_8 = arith.constant 0.000000e+00 : f32
    %15 = vector.broadcast %cst_8 : f32 to vector<16x1xf32>
    %c0_i32_9 = arith.constant 0 : i32
    %c0_10 = arith.constant 0 : index
    %16 = arith.index_cast %c0_i32_9 : i32 to index
    %c0_11 = arith.constant 0 : index
    %c0_12 = arith.constant 0 : index
    %17 = vector.load %arg2[%c0_10, %16, %c0_11, %c0_12] : memref<1x2x16x64xf32, #tpu.memory_space<vmem>>, vector<1x1x16x64xf32>
    %18 = vector.shape_cast %17 : vector<1x1x16x64xf32> to vector<16x64xf32>
    %19 = vector.broadcast %14 : vector<16x1xf32> to vector<16x64xf32>
    %20 = arith.subf %18, %19 : vector<16x64xf32>
    %21 = arith.mulf %20, %20 : vector<16x64xf32>
    %cst_13 = arith.constant dense<0.000000e+00> : vector<16xf32>
    %22 = vector.multi_reduction <add>, %21, %cst_13 [1] : vector<16x64xf32> to vector<16xf32>
    %23 = vector.shape_cast %22 : vector<16xf32> to vector<16x1xf32>
    %24 = arith.addf %15, %23 : vector<16x1xf32>
    %c1_i32_14 = arith.constant 1 : i32
    %c0_15 = arith.constant 0 : index
    %25 = arith.index_cast %c1_i32_14 : i32 to index
    %c0_16 = arith.constant 0 : index
    %c0_17 = arith.constant 0 : index
    %26 = vector.load %arg2[%c0_15, %25, %c0_16, %c0_17] : memref<1x2x16x64xf32, #tpu.memory_space<vmem>>, vector<1x1x16x64xf32>
    %27 = vector.shape_cast %26 : vector<1x1x16x64xf32> to vector<16x64xf32>
    %28 = vector.broadcast %14 : vector<16x1xf32> to vector<16x64xf32>
    %29 = arith.subf %27, %28 : vector<16x64xf32>
    %30 = arith.mulf %29, %29 : vector<16x64xf32>
    %cst_18 = arith.constant dense<0.000000e+00> : vector<16xf32>
    %31 = vector.multi_reduction <add>, %30, %cst_18 [1] : vector<16x64xf32> to vector<16xf32>
    %32 = vector.shape_cast %31 : vector<16xf32> to vector<16x1xf32>
    %33 = arith.addf %24, %32 : vector<16x1xf32>
    %c2_i32_19 = arith.constant 2 : i32
    %cst_20 = arith.constant 7.812500e-03 : f32
    %34 = vector.broadcast %cst_20 : f32 to vector<16x1xf32>
    %35 = arith.mulf %33, %34 : vector<16x1xf32>
    %cst_21 = arith.constant 9.99999974E-6 : f32
    %36 = vector.broadcast %cst_21 : f32 to vector<16x1xf32>
    %37 = arith.addf %35, %36 : vector<16x1xf32>
    %38 = math.rsqrt %37 : vector<16x1xf32>
    %c0_22 = arith.constant 0 : index
    %c0_23 = arith.constant 0 : index
    %39 = vector.load %arg3[%c0_22, %c0_23] : memref<16x1xf32, #tpu.memory_space<vmem>>, vector<16x1xf32>
    %40 = arith.mulf %38, %39 : vector<16x1xf32>
    %c0_24 = arith.constant 0 : index
    %c0_25 = arith.constant 0 : index
    %41 = vector.load %arg4[%c0_24, %c0_25] : memref<16x1xf32, #tpu.memory_space<vmem>>, vector<16x1xf32>
    %42 = arith.mulf %14, %40 : vector<16x1xf32>
    %43 = arith.subf %41, %42 : vector<16x1xf32>
    %c0_i32_26 = arith.constant 0 : i32
    %c0_27 = arith.constant 0 : index
    %44 = arith.index_cast %c0_i32_26 : i32 to index
    %c0_28 = arith.constant 0 : index
    %c0_29 = arith.constant 0 : index
    %45 = vector.load %arg2[%c0_27, %44, %c0_28, %c0_29] : memref<1x2x16x64xf32, #tpu.memory_space<vmem>>, vector<1x1x16x64xf32>
    %46 = vector.shape_cast %45 : vector<1x1x16x64xf32> to vector<16x64xf32>
    %47 = vector.broadcast %40 : vector<16x1xf32> to vector<16x64xf32>
    %48 = arith.mulf %46, %47 : vector<16x64xf32>
    %49 = vector.broadcast %43 : vector<16x1xf32> to vector<16x64xf32>
    %50 = arith.addf %48, %49 : vector<16x64xf32>
    %c0_30 = arith.constant 0 : index
    %51 = arith.index_cast %c0_i32_26 : i32 to index
    %c0_31 = arith.constant 0 : index
    %c0_32 = arith.constant 0 : index
    %52 = vector.load %arg5[%c0_30, %51, %c0_31, %c0_32] : memref<1x2x16x64xf32, #tpu.memory_space<vmem>>, vector<1x1x16x64xf32>
    %53 = vector.shape_cast %52 : vector<1x1x16x64xf32> to vector<16x64xf32>
    %54 = vector.shape_cast %50 : vector<16x64xf32> to vector<1x1x16x64xf32>
    tpu.vector_store %arg5[%c0_30, %51, %c0_31, %c0_32], %54 {strides = array<i32>} : memref<1x2x16x64xf32, #tpu.memory_space<vmem>>, vector<1x1x16x64xf32>,
    %c1_i32_33 = arith.constant 1 : i32
    %c0_34 = arith.constant 0 : index
    %55 = arith.index_cast %c1_i32_33 : i32 to index
    %c0_35 = arith.constant 0 : index
    %c0_36 = arith.constant 0 : index
    %56 = vector.load %arg2[%c0_34, %55, %c0_35, %c0_36] : memref<1x2x16x64xf32, #tpu.memory_space<vmem>>, vector<1x1x16x64xf32>
    %57 = vector.shape_cast %56 : vector<1x1x16x64xf32> to vector<16x64xf32>
    %58 = vector.broadcast %40 : vector<16x1xf32> to vector<16x64xf32>
    %59 = arith.mulf %57, %58 : vector<16x64xf32>
    %60 = vector.broadcast %43 : vector<16x1xf32> to vector<16x64xf32>
    %61 = arith.addf %59, %60 : vector<16x64xf32>
    %c0_37 = arith.constant 0 : index
    %62 = arith.index_cast %c1_i32_33 : i32 to index
    %c0_38 = arith.constant 0 : index
    %c0_39 = arith.constant 0 : index
    %63 = vector.load %arg5[%c0_37, %62, %c0_38, %c0_39] : memref<1x2x16x64xf32, #tpu.memory_space<vmem>>, vector<1x1x16x64xf32>
    %64 = vector.shape_cast %63 : vector<1x1x16x64xf32> to vector<16x64xf32>
    %65 = vector.shape_cast %61 : vector<16x64xf32> to vector<1x1x16x64xf32>
    tpu.vector_store %arg5[%c0_37, %62, %c0_38, %c0_39], %65 {strides = array<i32>} : memref<1x2x16x64xf32, #tpu.memory_space<vmem>>, vector<1x1x16x64xf32>,
    %c2_i32_40 = arith.constant 2 : i32
    return
  }
  func.func @transform_0(%arg0: i32, %arg1: i32) -> (i32, i32, i32, i32) {
    %c0_i32 = arith.constant 0 : i32
    %c0_i32_0 = arith.constant 0 : i32
    %c0_i32_1 = arith.constant 0 : i32
    return %arg0, %c0_i32, %arg1, %c0_i32_0 : i32, i32, i32, i32
  }
  func.func @transform_1(%arg0: i32, %arg1: i32) -> (i32, i32) {
    %c0_i32 = arith.constant 0 : i32
    %c0_i32_0 = arith.constant 0 : i32
    return %arg1, %c0_i32 : i32, i32
  }
  func.func @transform_2(%arg0: i32, %arg1: i32) -> (i32, i32) {
    %c0_i32 = arith.constant 0 : i32
    %c0_i32_0 = arith.constant 0 : i32
    return %arg1, %c0_i32 : i32, i32
  }
  func.func @transform_3(%arg0: i32, %arg1: i32) -> (i32, i32, i32, i32) {
    %c0_i32 = arith.constant 0 : i32
    %c0_i32_0 = arith.constant 0 : i32
    %c0_i32_1 = arith.constant 0 : i32
    return %arg0, %c0_i32, %arg1, %c0_i32_0 : i32, i32, i32, i32
  }
}

</mosaic_0001>

<llo_original>
// kernel: cdbn2d_train.1
$region0: #{cdbn2d_train.1}
  #allocation0 [shape = 'u32[]', space=smem, size = 0x4, offset = 0x4, fixed_abs, tag = 'smem constant byte address 0x4 - core index']
  #allocation1 [shape = 'u32[144,128]{1,0:T(1,128)}', space=vmem, size = 0x12000, scoped, tag = 'internal scratch']
  %s0 = inlined_call_operand.vmem [shape: f32[2,2,64,64], index: 0, kind: input, shape index: {}]
  %s1 = inlined_call_operand.vmem [shape: f32[64,1], index: 1, kind: input, shape index: {}]
  %s2 = inlined_call_operand.vmem [shape: f32[64,1], index: 2, kind: input, shape index: {}]
  %s3 = inlined_call_operand.vmem [shape: f32[2,2,64,64], index: 3, kind: output, shape index: {}]
  %s4 = sld [smem:[#allocation0]]
  $region117: #{cdbn2d_train.1} parent=0
    _
  %s6 = ssub.s32 1, %s4
  %s7 = scalar_select 0, %s6, %s4
  $region1: #{cdbn2d_train.1} parent=0
    #allocation2 [shape = 'u8[32768]{0}', space=vmem, size = 0x8000, scoped, tag = 'input window, operand 0']
    #allocation3 [shape = 'u8[32768]{0}', space=vmem, size = 0x8000, scoped, tag = 'output window, operand 0']
    loop: start=0, step=1, limit=10
    $region2: #{cdbn2d_train.1} parent=1 // loop_pre_header
      _
    $region3: #{cdbn2d_train.1} parent=1 // loop_header
      %s9 = sphi 0, %s13
      %p10 = scmp.ge.s32.totalorder %s9, 10
      %s16 = sphi 0, %s28
      %s17 = sphi 0, %s24
      %s18 = sphi 0, %s16
      %s19 = sphi 0, %s17
      %s20 = sphi 0, %s18
      %s21 = sphi 0, %s19
      %s33 = sphi 0, %s35
      %s36 = sphi 0, %s33
      %s37 = sphi 0, %s36
      %s53 = sphi 0, %s37
      %s59 = sphi 0, %s61
      %s62 = sphi 0, %s59
      %s63 = sphi 0, %s62
      %s79 = sphi 0, %s63
      %s85 = sphi 0, %s87
      %s88 = sphi 0, %s85
      %s89 = sphi 0, %s88
      %s105 = sphi 0, %s89
      %s113 = sphi 0, %s115
      %s116 = sphi 0, %s113
      %s117 = sphi 0, %s116
      %s133 = sphi 0, %s117
    $region4: #{cdbn2d_train.1} parent=1 // loop_header_branch
      %12 = sbr.rel (%p10) target = $region8
    $region5: #{cdbn2d_train.1} parent=1 // loop_body
      %s14 = ssub.s32 %s9, 1
      %s15 = ssub.s32 %s9, 2
      %s22 = sadd.s32 1, %s17
      %p23 = scmp.ge.s32.totalorder %s22, 4
      %s24 = scalar_select %p23, 0, %s22
      %s25 = sadd.s32 1, %s16
      %s26 = scalar_select %p23, %s25, %s16
      %p27 = scmp.ge.s32.totalorder %s26, 2
      %s28 = scalar_select %p27, 0, %s26
      %s29 = ssub.s32 %s16, %s28
      %s30 = ssub.s32 %s17, %s24
      %s31 = sor.u32 %s29, %s30
      %p32 = scmp.eq.s32.totalorder %s31, 0
      %s34 = sadd.s32 %s33, 1
      %s35 = scalar_select %p32, %s33, %s34
      %p38 = pneg %p32
      %p39 = scmp.eq.s32.totalorder %s9, 7
      %p40 = por %p38, %p39
      %p41 = scmp.ne.s32.totalorder %s33, %s36
      %p42 = scmp.eq.s32.totalorder %s9, 0
      %p43 = por %p41, %p42
      %p44 = scmp.ne.s32.totalorder %s33, %s36
      %p45 = scmp.eq.s32.totalorder %s14, 7
      %p46 = por %p44, %p45
      %p47 = scmp.ne.s32.totalorder %s36, %s37
      %p48 = scmp.eq.s32.totalorder %s14, 0
      %p49 = por %p47, %p48
      %p50 = scmp.ne.s32.totalorder %s36, %s37
      %p51 = scmp.eq.s32.totalorder %s15, 7
      %p52 = por %p50, %p51
      %p54 = scmp.ne.s32.totalorder %s37, %s53
      %p55 = scmp.eq.s32.totalorder %s15, 0
      %p56 = por %p54, %p55
      %s57 = ssub.s32 %s17, %s24
      %p58 = scmp.eq.s32.totalorder %s57, 0
      %s60 = sadd.s32 %s59, 1
      %s61 = scalar_select %p58, %s59, %s60
      %p64 = pneg %p58
      %p65 = scmp.eq.s32.totalorder %s9, 7
      %p66 = por %p64, %p65
      %p67 = scmp.ne.s32.totalorder %s59, %s62
      %p68 = scmp.eq.s32.totalorder %s9, 0
      %p69 = por %p67, %p68
      %p70 = scmp.ne.s32.totalorder %s59, %s62
      %p71 = scmp.eq.s32.totalorder %s14, 7
      %p72 = por %p70, %p71
      %p73 = scmp.ne.s32.totalorder %s62, %s63
      %p74 = scmp.eq.s32.totalorder %s14, 0
      %p75 = por %p73, %p74
      %p76 = scmp.ne.s32.totalorder %s62, %s63
      %p77 = scmp.eq.s32.totalorder %s15, 7
      %p78 = por %p76, %p77
      %p80 = scmp.ne.s32.totalorder %s63, %s79
      %p81 = scmp.eq.s32.totalorder %s15, 0
      %p82 = por %p80, %p81
      %s83 = ssub.s32 %s17, %s24
      %p84 = scmp.eq.s32.totalorder %s83, 0
      %s86 = sadd.s32 %s85, 1
      %s87 = scalar_select %p84, %s85, %s86
      %p90 = pneg %p84
      %p91 = scmp.eq.s32.totalorder %s9, 7
      %p92 = por %p90, %p91
      %p93 = scmp.ne.s32.totalorder %s85, %s88
      %p94 = scmp.eq.s32.totalorder %s9, 0
      %p95 = por %p93, %p94
      %p96 = scmp.ne.s32.totalorder %s85, %s88
      %p97 = scmp.eq.s32.totalorder %s14, 7
      %p98 = por %p96, %p97
      %p99 = scmp.ne.s32.totalorder %s88, %s89
      %p100 = scmp.eq.s32.totalorder %s14, 0
      %p101 = por %p99, %p100
      %p102 = scmp.ne.s32.totalorder %s88, %s89
      %p103 = scmp.eq.s32.totalorder %s15, 7
      %p104 = por %p102, %p103
      %p106 = scmp.ne.s32.totalorder %s89, %s105
      %p107 = scmp.eq.s32.totalorder %s15, 0
      %p108 = por %p106, %p107
      %s109 = ssub.s32 %s16, %s28
      %s110 = ssub.s32 %s17, %s24
      %s111 = sor.u32 %s109, %s110
      %p112 = scmp.eq.s32.totalorder %s111, 0
      %s114 = sadd.s32 %s113, 1
      %s115 = scalar_select %p112, %s113, %s114
      %p118 = pneg %p112
      %p119 = scmp.eq.s32.totalorder %s9, 7
      %p120 = por %p118, %p119
      %p121 = scmp.ne.s32.totalorder %s113, %s116
      %p122 = scmp.eq.s32.totalorder %s9, 0
      %p123 = por %p121, %p122
      %p124 = scmp.ne.s32.totalorder %s113, %s116
      %p125 = scmp.eq.s32.totalorder %s14, 7
      %p126 = por %p124, %p125
      %p127 = scmp.ne.s32.totalorder %s116, %s117
      %p128 = scmp.eq.s32.totalorder %s14, 0
      %p129 = por %p127, %p128
      %p130 = scmp.ne.s32.totalorder %s116, %s117
      %p131 = scmp.eq.s32.totalorder %s15, 7
      %p132 = por %p130, %p131
      %p134 = scmp.ne.s32.totalorder %s117, %s133
      %p135 = scmp.eq.s32.totalorder %s15, 0
      %p136 = por %p134, %p135
      %p137 = scmp.le.s32.totalorder 1, %s9
      %p138 = scmp.lt.s32.totalorder %s9, 9
      %p139 = pnand %p137, %p138
      %p140 = pneg %p139
      // Predicated region
      $region9: #{cdbn2d_train.1} parent=5 // pred_check
        _
      $region10: #{cdbn2d_train.1} parent=5 // pred_check_branch
        %142 = sbr.rel (%p139) target = $region12
      $region11: #{cdbn2d_train.1} parent=5 // pred_region
        %s143 = ssub.s32 %s9, 1
      $region12: #{cdbn2d_train.1} parent=5 // pred_fallthru
        _
      %p144 = scmp.lt.s32.totalorder %s9, 8
      // Predicated region
      $region13: #{cdbn2d_train.1} parent=5 // pred_check
        %p145 = pneg %p144
      $region14: #{cdbn2d_train.1} parent=5 // pred_check_branch
        %147 = sbr.rel (%p145) target = $region16
      $region15: #{cdbn2d_train.1} parent=5 // pred_region
        // Predicated region
        $region17: #{cdbn2d_train.1} parent=15 // pred_check
          %p148 = pneg %p43
        $region18: #{cdbn2d_train.1} parent=15 // pred_check_branch
          %150 = sbr.rel (%p148) target = $region20
        $region19: #{cdbn2d_train.1} parent=15 // pred_region
          %s151 = sand.u32 %s33, 1
          %s152 = sand.u32 %s33, 1
          %s153 = smul.addr %s152, 32
          %s154 = scalar_lea.vmem [#allocation2], %s153
          %s155 = smul.u32 2, %s17
          %s156 = smul.addr %s16, 16
          %s157 = sadd.s32 %s155, %s156
          %s158 = smul.addr %s157, 8
          %s159 = scalar_lea.vmem %s0, %s158
          // Predicated region
          $region21: #{cdbn2d_train.1} parent=19 // pred_check
            _
          $region22: #{cdbn2d_train.1} parent=19 // pred_check_branch
            %161 = sbr.rel (0) target = $region24
          $region23: #{cdbn2d_train.1} parent=19 // pred_region
            // Predicated region
            $region25: #{cdbn2d_train.1} parent=23 // pred_check
              _
            $region26: #{cdbn2d_train.1} parent=23 // pred_check_branch
              %163 = sbr.rel (0) target = $region28
            $region27: #{cdbn2d_train.1} parent=23 // pred_region
              // Predicated region
              $region40: #{cdbn2d_train.1} parent=27 // pred_check
                _
              $region41: #{cdbn2d_train.1} parent=27 // pred_check_branch
                %185 = sbr.rel (0) target = $region43
              $region42: #{cdbn2d_train.1} parent=27 // pred_region
                loop: start=0, step=1, limit=1
                $region44: #{cdbn2d_train.1} parent=42 // loop_pre_header
                  _
                $region45: #{cdbn2d_train.1} parent=42 // loop_header
                  %s187 = sphi 0, %s191
                  %p188 = scmp.ge.s32.totalorder %s187, 1
                  %s192 = sphi %s159, %s159
                  %s193 = sphi %s154, %s154
                $region46: #{cdbn2d_train.1} parent=42 // loop_header_branch
                  %190 = sbr.rel (%p188) target = $region50
                $region47: #{cdbn2d_train.1} parent=42 // loop_body
                  %v194 = vld [vmem:[%s192] sm:$0xff]
                  %195 = vst [vmem:[%s193] sm:$0xff] %v194
                  %v196 = vld [vmem:[%s192 + $0x8] sm:$0xff]
                  %197 = vst [vmem:[%s193 + $0x8] sm:$0xff] %v196
                  %v198 = vld [vmem:[%s192 + $0x40] sm:$0xff]
                  %199 = vst [vmem:[%s193 + $0x10] sm:$0xff] %v198
                  %v200 = vld [vmem:[%s192 + $0x48] sm:$0xff]
                  %201 = vst [vmem:[%s193 + $0x18] sm:$0xff] %v200
                $region48: #{cdbn2d_train.1} parent=42 // loop_footer
                  %s191 = sadd.s32 1, %s187
                $region49: #{cdbn2d_train.1} parent=42 // loop_footer_branch
                  %186 = sbr.rel target = $region45
                $region50: #{cdbn2d_train.1} parent=42 // loop_exit
                  _
              $region43: #{cdbn2d_train.1} parent=27 // pred_fallthru
                _
              // Predicated region
              $region51: #{cdbn2d_train.1} parent=27 // pred_check
                _
              $region52: #{cdbn2d_train.1} parent=27 // pred_check_branch
                %203 = sbr.rel target = $region54
              $region53: #{cdbn2d_train.1} parent=27 // pred_region
                _
              $region54: #{cdbn2d_train.1} parent=27 // pred_fallthru
                _
            $region28: #{cdbn2d_train.1} parent=23 // pred_fallthru
              _
            // Predicated region
            $region29: #{cdbn2d_train.1} parent=23 // pred_check
              _
            $region30: #{cdbn2d_train.1} parent=23 // pred_check_branch
              %165 = sbr.rel target = $region32
            $region31: #{cdbn2d_train.1} parent=23 // pred_region
              %s167 = ssub.s32 256, 1
              loop: start=0, step=1, limit=1
              $region33: #{cdbn2d_train.1} parent=31 // loop_pre_header
                _
              $region34: #{cdbn2d_train.1} parent=31 // loop_header
                %s169 = sphi 0, %s173
                %p170 = scmp.ge.s32.totalorder %s169, 1
                %s174 = sphi %s159, %s159
                %s175 = sphi %s154, %s154
              $region35: #{cdbn2d_train.1} parent=31 // loop_header_branch
                %172 = sbr.rel (%p170) target = $region39
              $region36: #{cdbn2d_train.1} parent=31 // loop_body
                %v176 = vld [vmem:[%s174] sm:%s167]
                %177 = vst [vmem:[%s175] sm:%s167] %v176
                %v178 = vld [vmem:[%s174 + $0x8] sm:%s167]
                %179 = vst [vmem:[%s175 + $0x8] sm:%s167] %v178
                %v180 = vld [vmem:[%s174 + $0x40] sm:%s167]
                %181 = vst [vmem:[%s175 + $0x10] sm:%s167] %v180
                %v182 = vld [vmem:[%s174 + $0x48] sm:%s167]
                %183 = vst [vmem:[%s175 + $0x18] sm:%s167] %v182
              $region37: #{cdbn2d_train.1} parent=31 // loop_footer
                %s173 = sadd.s32 1, %s169
              $region38: #{cdbn2d_train.1} parent=31 // loop_footer_branch
                %168 = sbr.rel target = $region34
              $region39: #{cdbn2d_train.1} parent=31 // loop_exit
                _
            $region32: #{cdbn2d_train.1} parent=23 // pred_fallthru
              _
          $region24: #{cdbn2d_train.1} parent=19 // pred_fallthru
            _
          %204 = vnop
        $region20: #{cdbn2d_train.1} parent=15 // pred_fallthru
          _
        // Predicated region
        $region55: #{cdbn2d_train.1} parent=15 // pred_check
          %p205 = pneg %p69
        $region56: #{cdbn2d_train.1} parent=15 // pred_check_branch
          %207 = sbr.rel (%p205) target = $region58
        $region57: #{cdbn2d_train.1} parent=15 // pred_region
          %s208 = smul.u32 2, %s17
          %p209 = scmp.lt.s32.totalorder %s208, 7
          %s210 = scalar_select %p209, %s208, 7
          %s211 = smul.addr %s210, 8
          %s212 = scalar_lea.vmem %s1, %s211
          %s213 = smul.u32 2, %s17
        $region58: #{cdbn2d_train.1} parent=15 // pred_fallthru
          _
        // Predicated region
        $region59: #{cdbn2d_train.1} parent=15 // pred_check
          %p214 = pneg %p95
        $region60: #{cdbn2d_train.1} parent=15 // pred_check_branch
          %216 = sbr.rel (%p214) target = $region62
        $region61: #{cdbn2d_train.1} parent=15 // pred_region
          %s217 = smul.u32 2, %s17
          %p218 = scmp.lt.s32.totalorder %s217, 7
          %s219 = scalar_select %p218, %s217, 7
          %s220 = smul.addr %s219, 8
          %s221 = scalar_lea.vmem %s2, %s220
          %s222 = smul.u32 2, %s17
        $region62: #{cdbn2d_train.1} parent=15 // pred_fallthru
          _
      $region16: #{cdbn2d_train.1} parent=5 // pred_fallthru
        _
      %p223 = scmp.le.s32.totalorder 1, %s9
      %p224 = scmp.lt.s32.totalorder %s9, 9
      %p225 = pnand %p223, %p224
      %p226 = pneg %p225
      // Predicated region
      $region63: #{cdbn2d_train.1} parent=5 // pred_check
        _
      $region64: #{cdbn2d_train.1} parent=5 // pred_check_branch
        %228 = sbr.rel (%p225) target = $region66
      $region65: #{cdbn2d_train.1} parent=5 // pred_region
        %s229 = ssub.s32 %s9, 1
        %s230 = sand.u32 %s36, 1
        %s231 = sand.u32 %s36, 1
        %s232 = smul.addr %s231, 32
        %s233 = scalar_lea.vmem [#allocation2], %s232
        // Predicated region
        $region67: #{cdbn2d_train.1} parent=65 // pred_check
          %p234 = pneg %p49
        $region68: #{cdbn2d_train.1} parent=65 // pred_check_branch
          %236 = sbr.rel (%p234) target = $region70
        $region69: #{cdbn2d_train.1} parent=65 // pred_region
          _
        $region70: #{cdbn2d_train.1} parent=65 // pred_fallthru
          _
        %s237 = sand.u32 %s36, 1
        %s238 = sand.u32 %s36, 1
        %s239 = smul.addr %s238, 32
        %s240 = scalar_lea.vmem [#allocation2], %s239
        %p241 = pneg %p49
        %p242 = pneg %p46
        %s243 = smul.u32 2, %s19
        %p244 = scmp.lt.s32.totalorder %s243, 7
        %s245 = scalar_select %p244, %s243, 7
        %s246 = smul.addr %s245, 8
        %s247 = scalar_lea.vmem %s1, %s246
        %p248 = pneg %p75
        %p249 = pneg %p72
        %s250 = smul.u32 2, %s19
        %p251 = scmp.lt.s32.totalorder %s250, 7
        %s252 = scalar_select %p251, %s250, 7
        %s253 = smul.addr %s252, 8
        %s254 = scalar_lea.vmem %s2, %s253
        %p255 = pneg %p101
        %p256 = pneg %p98
        %p257 = pneg %p129
        %p258 = pneg %p126
        %s259 = sand.u32 %s116, 1
        %s260 = sand.u32 %s116, 1
        %s261 = smul.addr %s260, 32
        %s262 = scalar_lea.vmem [#allocation3], %s261
        %s263 = smul.u32 2, %s19
        %s264 = smul.u32 2, %s19
        %p265 = scmp.lt.s32.totalorder %s264, 7
        %s266 = scalar_select %p265, %s264, 7
        %s267 = smul.addr %s266, 8
        %s268 = scalar_lea.vmem %s1, %s267
        %s269 = smul.u32 2, %s19
        %s270 = smul.u32 2, %s19
        %p271 = scmp.lt.s32.totalorder %s270, 7
        %s272 = scalar_select %p271, %s270, 7
        %s273 = smul.addr %s272, 8
        %s274 = scalar_lea.vmem %s2, %s273
        %s275 = smul.u32 2, %s19
        %s276 = smul.u32 2, %s19
        %v277 = vld [vmem:[%s233] sm:$0xff]
        %v278 = vld [vmem:[%s233 + $0x8] sm:$0xff]
        %vm279 = vcmask 523264
        %v280 = vsel %vm279, %v277, 0.0
        %281 = vadd.xlane.f32.xlu0 %v280
        %v282 = vpop.xlane.xlu0 %281
        %v283 = vsel %vm279, %v278, 0.0
        %284 = vadd.xlane.f32.xlu0 %v283
        %v285 = vpop.xlane.xlu0 %284
        %v286 = vadd.f32 %v282, 0.0
        %v287 = vadd.f32 %v285, 0.0
        %s288 = scalar_lea.vmem %s233, 16 [#allocation2]
        %v289 = vld [vmem:[%s288] sm:$0xff]
        %v290 = vld [vmem:[%s288 + $0x8] sm:$0xff]
        %v291 = vsel %vm279, %v289, 0.0
        %292 = vadd.xlane.f32.xlu0 %v291
        %v293 = vpop.xlane.xlu0 %292
        %v294 = vsel %vm279, %v290, 0.0
        %295 = vadd.xlane.f32.xlu0 %v294
        %v296 = vpop.xlane.xlu0 %295
        %v297 = vadd.f32 %v286, %v293
        %v298 = vadd.f32 %v287, %v296
        %v299 = vmul.f32 %v297, 0.0078125
        %v300 = vmul.f32 %v298, 0.0078125
        %v301 = vsub.f32 %v277, %v299
        %v302 = vsub.f32 %v278, %v300
        %v303 = vmul.f32 %v301, %v301
        %v304 = vmul.f32 %v302, %v302
        %v305 = vsel %vm279, %v303, 0.0
        %306 = vadd.xlane.f32.xlu0 %v305
        %v307 = vpop.xlane.xlu0 %306
        %v308 = vsel %vm279, %v304, 0.0
        %309 = vadd.xlane.f32.xlu0 %v308
        %v310 = vpop.xlane.xlu0 %309
        %v311 = vadd.f32 %v307, 0.0
        %v312 = vadd.f32 %v310, 0.0
        %v313 = vsub.f32 %v289, %v299
        %v314 = vsub.f32 %v290, %v300
        %v315 = vmul.f32 %v313, %v313
        %v316 = vmul.f32 %v314, %v314
        %v317 = vsel %vm279, %v315, 0.0
        %318 = vadd.xlane.f32.xlu0 %v317
        %v319 = vpop.xlane.xlu0 %318
        %v320 = vsel %vm279, %v316, 0.0
        %321 = vadd.xlane.f32.xlu0 %v320
        %v322 = vpop.xlane.xlu0 %321
        %v323 = vadd.f32 %v311, %v319
        %v324 = vadd.f32 %v312, %v322
        %v325 = vmul.f32 %v323, 0.0078125
        %v326 = vmul.f32 %v324, 0.0078125
        %v327 = vadd.f32 %v325, 1e-05
        %v328 = vadd.f32 %v326, 1e-05
        %v329 = vrsqrt.pop %v327
        %v330 = vrsqrt.pop %v328
        %v331 = vld [vmem:[%s268] sm:$0xff]
        %v332 = vld [vmem:[%s268 + $0x8] sm:$0xff]
        %v333 = vmul.f32 %v329, %v331
        %v334 = vmul.f32 %v330, %v332
        %v335 = vld [vmem:[%s274] sm:$0xff]
        %v336 = vld [vmem:[%s274 + $0x8] sm:$0xff]
        %v337 = vmul.f32 %v299, %v333
        %v338 = vmul.f32 %v300, %v334
        %v339 = vsub.f32 %v335, %v337
        %v340 = vsub.f32 %v336, %v338
        %342 = vset.pattern.permute.xlu0 0
        %343 = vperm.xlu0 %342, %v333
        %v344 = vpop.permute.xlu0 %343
        %347 = vset.pattern.permute.xlu0 0
        %348 = vperm.xlu0 %347, %v334
        %v349 = vpop.permute.xlu0 %348
        %v351 = vmul.f32 %v277, %v344
        %v352 = vmul.f32 %v278, %v349
        %354 = vset.pattern.permute.xlu0 0
        %355 = vperm.xlu0 %354, %v339
        %v356 = vpop.permute.xlu0 %355
        %359 = vset.pattern.permute.xlu0 0
        %360 = vperm.xlu0 %359, %v340
        %v361 = vpop.permute.xlu0 %360
        %v363 = vadd.f32 %v351, %v356
        %v364 = vadd.f32 %v352, %v361
        %365 = vst.msk [vmem:[%s262] sm:$0xff] %vm279, %v363
        %366 = vst.msk [vmem:[%s262 + $0x8] sm:$0xff] %vm279, %v364
        %v367 = vld [vmem:[%s288] sm:$0xff]
        %v368 = vld [vmem:[%s288 + $0x8] sm:$0xff]
        %v369 = vmul.f32 %v367, %v344
        %v370 = vmul.f32 %v368, %v349
        %v371 = vadd.f32 %v369, %v356
        %v372 = vadd.f32 %v370, %v361
        %s373 = scalar_lea.vmem %s262, 16 [#allocation3]
        %374 = vst.msk [vmem:[%s373] sm:$0xff] %vm279, %v371
        %375 = vst.msk [vmem:[%s373 + $0x8] sm:$0xff] %vm279, %v372
        %s376 = sand.u32 %s116, 1
        %s377 = sand.u32 %s116, 1
        %s378 = smul.addr %s377, 32
        %s379 = scalar_lea.vmem [#allocation3], %s378
        // Predicated region
        $region71: #{cdbn2d_train.1} parent=65 // pred_check
          %p380 = pneg %p126
        $region72: #{cdbn2d_train.1} parent=65 // pred_check_branch
          %382 = sbr.rel (%p380) target = $region74
        $region73: #{cdbn2d_train.1} parent=65 // pred_region
          %s383 = smul.u32 2, %s19
          %s384 = smul.addr %s18, 16
          %s385 = sadd.s32 %s383, %s384
          %s386 = smul.addr %s385, 8
          %s387 = scalar_lea.vmem %s3, %s386
          // Predicated region
          $region75: #{cdbn2d_train.1} parent=73 // pred_check
            _
          $region76: #{cdbn2d_train.1} parent=73 // pred_check_branch
            %389 = sbr.rel (0) target = $region78
          $region77: #{cdbn2d_train.1} parent=73 // pred_region
            // Predicated region
            $region79: #{cdbn2d_train.1} parent=77 // pred_check
              _
            $region80: #{cdbn2d_train.1} parent=77 // pred_check_branch
              %391 = sbr.rel (0) target = $region82
            $region81: #{cdbn2d_train.1} parent=77 // pred_region
              // Predicated region
              $region94: #{cdbn2d_train.1} parent=81 // pred_check
                _
              $region95: #{cdbn2d_train.1} parent=81 // pred_check_branch
                %413 = sbr.rel (0) target = $region97
              $region96: #{cdbn2d_train.1} parent=81 // pred_region
                loop: start=0, step=1, limit=1
                $region98: #{cdbn2d_train.1} parent=96 // loop_pre_header
                  _
                $region99: #{cdbn2d_train.1} parent=96 // loop_header
                  %s415 = sphi 0, %s419
                  %p416 = scmp.ge.s32.totalorder %s415, 1
                  %s420 = sphi %s379, %s379
                  %s421 = sphi %s387, %s387
                $region100: #{cdbn2d_train.1} parent=96 // loop_header_branch
                  %418 = sbr.rel (%p416) target = $region104
                $region101: #{cdbn2d_train.1} parent=96 // loop_body
                  %v422 = vld [vmem:[%s420] sm:$0xff]
                  %423 = vst [vmem:[%s421] sm:$0xff] %v422
                  %v424 = vld [vmem:[%s420 + $0x8] sm:$0xff]
                  %425 = vst [vmem:[%s421 + $0x8] sm:$0xff] %v424
                  %v426 = vld [vmem:[%s420 + $0x10] sm:$0xff]
                  %427 = vst [vmem:[%s421 + $0x40] sm:$0xff] %v426
                  %v428 = vld [vmem:[%s420 + $0x18] sm:$0xff]
                  %429 = vst [vmem:[%s421 + $0x48] sm:$0xff] %v428
                $region102: #{cdbn2d_train.1} parent=96 // loop_footer
                  %s419 = sadd.s32 1, %s415
                $region103: #{cdbn2d_train.1} parent=96 // loop_footer_branch
                  %414 = sbr.rel target = $region99
                $region104: #{cdbn2d_train.1} parent=96 // loop_exit
                  _
              $region97: #{cdbn2d_train.1} parent=81 // pred_fallthru
                _
              // Predicated region
              $region105: #{cdbn2d_train.1} parent=81 // pred_check
                _
              $region106: #{cdbn2d_train.1} parent=81 // pred_check_branch
                %431 = sbr.rel target = $region108
              $region107: #{cdbn2d_train.1} parent=81 // pred_region
                _
              $region108: #{cdbn2d_train.1} parent=81 // pred_fallthru
                _
            $region82: #{cdbn2d_train.1} parent=77 // pred_fallthru
              _
            // Predicated region
            $region83: #{cdbn2d_train.1} parent=77 // pred_check
              _
            $region84: #{cdbn2d_train.1} parent=77 // pred_check_branch
              %393 = sbr.rel target = $region86
            $region85: #{cdbn2d_train.1} parent=77 // pred_region
              %s395 = ssub.s32 256, 1
              loop: start=0, step=1, limit=1
              $region87: #{cdbn2d_train.1} parent=85 // loop_pre_header
                _
              $region88: #{cdbn2d_train.1} parent=85 // loop_header
                %s397 = sphi 0, %s401
                %p398 = scmp.ge.s32.totalorder %s397, 1
                %s402 = sphi %s379, %s379
                %s403 = sphi %s387, %s387
              $region89: #{cdbn2d_train.1} parent=85 // loop_header_branch
                %400 = sbr.rel (%p398) target = $region93
              $region90: #{cdbn2d_train.1} parent=85 // loop_body
                %v404 = vld [vmem:[%s402] sm:%s395]
                %405 = vst [vmem:[%s403] sm:%s395] %v404
                %v406 = vld [vmem:[%s402 + $0x8] sm:%s395]
                %407 = vst [vmem:[%s403 + $0x8] sm:%s395] %v406
                %v408 = vld [vmem:[%s402 + $0x10] sm:%s395]
                %409 = vst [vmem:[%s403 + $0x40] sm:%s395] %v408
                %v410 = vld [vmem:[%s402 + $0x18] sm:%s395]
                %411 = vst [vmem:[%s403 + $0x48] sm:%s395] %v410
              $region91: #{cdbn2d_train.1} parent=85 // loop_footer
                %s401 = sadd.s32 1, %s397
              $region92: #{cdbn2d_train.1} parent=85 // loop_footer_branch
                %396 = sbr.rel target = $region88
              $region93: #{cdbn2d_train.1} parent=85 // loop_exit
                _
            $region86: #{cdbn2d_train.1} parent=77 // pred_fallthru
              _
          $region78: #{cdbn2d_train.1} parent=73 // pred_fallthru
            _
          %432 = vnop
        $region74: #{cdbn2d_train.1} parent=65 // pred_fallthru
          _
      $region66: #{cdbn2d_train.1} parent=5 // pred_fallthru
        _
      %p433 = scmp.le.s32.totalorder 2, %s9
      // Predicated region
      $region109: #{cdbn2d_train.1} parent=5 // pred_check
        %p434 = pneg %p433
      $region110: #{cdbn2d_train.1} parent=5 // pred_check_branch
        %436 = sbr.rel (%p434) target = $region112
      $region111: #{cdbn2d_train.1} parent=5 // pred_region
        %s437 = ssub.s32 %s9, 2
        // Predicated region
        $region113: #{cdbn2d_train.1} parent=111 // pred_check
          %p438 = pneg %p132
        $region114: #{cdbn2d_train.1} parent=111 // pred_check_branch
          %440 = sbr.rel (%p438) target = $region116
        $region115: #{cdbn2d_train.1} parent=111 // pred_region
          %s441 = sand.u32 %s117, 1
          %s442 = sand.u32 %s117, 1
          %s443 = smul.addr %s442, 32
          %s444 = scalar_lea.vmem [#allocation3], %s443
        $region116: #{cdbn2d_train.1} parent=111 // pred_fallthru
          _
      $region112: #{cdbn2d_train.1} parent=5 // pred_fallthru
        _
    $region6: #{cdbn2d_train.1} parent=1 // loop_footer
      %s13 = sadd.s32 1, %s9
    $region7: #{cdbn2d_train.1} parent=1 // loop_footer_branch
      %8 = sbr.rel target = $region3
    $region8: #{cdbn2d_train.1} parent=1 // loop_exit
      _

</llo_original>
